<compile_context>
chip_gen: v7x
topology: tpu7x:2x2x1
jax: 0.10.0
libtpu: 0.0.40
codegen_flags: <defaults>
</compile_context>

<pallas_src>
import jax
import jax.numpy as jnp
import numpy as np
from jax.experimental import pallas as pl
from jax.experimental.pallas import tpu as pltpu


# ---------------------------------------------------------------------------
# Kernel (feature-major: features on sublanes, batch on lanes)
# ---------------------------------------------------------------------------
def make_dynamics_kernel(min_state, max_state, n_fused, h0_width, state_size):
    """n_fused = number of fused layers AFTER the (stacked) first layer."""

    def kernel(*refs):
        # refs: xuT, W0T_stacked, b0T, then n_fused*(WT, bT), then SelT_dt, out
        xu_ref, w0t_ref, b0t_ref = refs[:3]
        layer_refs = refs[3:3 + 2 * n_fused]
        selt_ref = refs[3 + 2 * n_fused]
        out_ref = refs[-1]

        xuT = xu_ref[...]                                   # (S+Act, TB)

        # One matmul produces both the first hidden layer and the tiled
        # x/u replication:  combined = [W0 | T]^T @ xu^T   -> (h0 + n, TB)
        combined = jnp.dot(w0t_ref[...], xuT,
                           preferred_element_type=jnp.float32)
        hT = combined[:h0_width, :] + b0t_ref[...]          # (h0, TB)
        tiledT = combined[h0_width:, :]                     # (n,  TB)
        if n_fused > 0:
            hT = jnp.maximum(hT, 0.0)

        # Remaining fused (block-diagonal) layers; ReLU on all but the last.
        for i in range(n_fused):
            wT = layer_refs[2 * i][...]                     # (out, in)
            bT = layer_refs[2 * i + 1][...]                 # (out, 1)
            hT = jnp.dot(wT, hT, preferred_element_type=jnp.float32) + bT
            if i < n_fused - 1:
                hT = jnp.maximum(hT, 0.0)
        # hT = [A_flat | B_flat]^T  of shape (S*S + S*Act, TB)

        # Bilinear contraction (dt already folded into SelT):
        #   dx^T[i, b] = dt * ( sum_j A[b,i,j]*x[b,j] + sum_k B[b,i,k]*u[b,k] )
        dxT = jnp.dot(selt_ref[...], hT * tiledT,
                      preferred_element_type=jnp.float32)   # (S, TB)

        xT = xuT[:state_size, :]                            # (S, TB)
        out_ref[...] = jnp.clip(xT + dxT, min_state, max_state).astype(
            out_ref.dtype)

    return kernel


# ---------------------------------------------------------------------------
# Wrapper-side parameter fusion / constant construction
# ---------------------------------------------------------------------------
def make_contraction_constants(S, Act):
    """Constant 0/1 replication (T) and block-sum selector (Sel) matrices.

    T  : (S+Act, n) with  (x|u)@T giving tiled[b, i*S+j]=x[b,j],
                                         tiled[b, S*S+i*Act+k]=u[b,k]
    Sel: (n, S)    with  (AB_flat * tiled) @ Sel giving dx[b, i]
    """
    n = S * S + S * Act
    T = np.zeros((S + Act, n), np.float32)
    sel = np.zeros((n, S), np.float32)
    for i in range(S):
        for j in range(S):
            T[j, i * S + j] = 1.0
            sel[i * S + j, i] = 1.0
        for k in range(Act):
            T[S + k, S * S + i * Act + k] = 1.0
            sel[S * S + i * Act + k, i] = 1.0
    return T, sel


def build_fused_params(a_params, b_params, S, Act, x_col, y_col, dt):
    """Fuse the A and B MLPs into one, stack [W0 | T], fold dt into Sel.

    a_params / b_params are lists of (W (in,out), b (1,out)).
    Returns feature-major (transposed) parameters ready for the kernel.
    """
    # First layer: concatenate outputs column-wise, fold pose-zeroing into W0.
    w0a, b0a = a_params[0]
    w0b, b0b = b_params[0]
    w0 = jnp.concatenate([w0a, w0b], axis=1)              # (S+Act, hA0+hB0)
    w0 = w0.at[x_col, :].set(0.0).at[y_col, :].set(0.0)   # fold xu[:,col]=0
    h0_width = w0.shape[1]

    T, sel = make_contraction_constants(S, Act)
    # Stack W0 and T column-wise, then transpose for feature-major matmul.
    w0t_stacked = jnp.concatenate([w0, jnp.asarray(T)], axis=1).T  # (h0+n, S+Act)
    b0t = jnp.concatenate([b0a, b0b], axis=1).T            # (h0, 1)

    # Deeper layers: block-diagonal weights, concatenated biases (transposed).
    fused_layers = []
    for i in range(1, len(a_params)):
        wa, ba = a_params[i]
        wb, bb = b_params[i]
        ia, oa = wa.shape
        ib, ob = wb.shape
        w = jnp.zeros((ia + ib, oa + ob), dtype=jnp.float32)
        w = w.at[:ia, :oa].set(wa).at[ia:, oa:].set(wb)
        b = jnp.concatenate([ba, bb], axis=1)
        fused_layers.append((w.T, b.T))                     # (out,in), (out,1)

    selt_dt = jnp.asarray((sel * dt).T)                     # (S, n), dt folded
    return w0t_stacked, b0t, fused_layers, selt_dt, h0_width


_LANE = 128
_MAX_TB = 2048


def _choose_batch_tile(batch):
    """Lane-aligned batch tile + padded batch size.

    - always a multiple of 128 (lane-dense loads/stores),
    - capped at _MAX_TB (per-step VMEM << 1 MiB, so 2048 is comfortable),
    - >= 2 grid steps for batch > 128 so both v7x TensorCores get work.
    """
    if batch <= _LANE:
        tb = _LANE
    else:
        half = -(-batch // 2)                    # ceil(batch / 2)
        tb = min(_MAX_TB, _LANE * (-(-half // _LANE)))
    padded = tb * (-(-batch // tb))
    return tb, padded


# ---------------------------------------------------------------------------
# Forward wrapper
# ---------------------------------------------------------------------------
def dynamics_forward(x, u, a_params, b_params, column_names,
                     dt, min_state, max_state):
    batch, state_size = x.shape
    action_size = u.shape[1]
    x_col = column_names.index('poses_x')
    y_col = column_names.index('poses_y')

    w0t_stacked, b0t, fused_layers, selt_dt, h0_width = build_fused_params(
        a_params, b_params, state_size, action_size, x_col, y_col, dt)
    n_fused = len(fused_layers)

    # Feature-major input: (S+Act, padded_batch), zero-padded along lanes.
    xuT = jnp.concatenate([x, u], axis=-1).T               # (S+Act, batch)
    tb, padded = _choose_batch_tile(batch)
    if padded != batch:
        xuT = jnp.pad(xuT, ((0, 0), (0, padded - batch)))

    kernel = make_dynamics_kernel(min_state, max_state, n_fused,
                                  h0_width, state_size)

    flat_inputs = [xuT, w0t_stacked, b0t]
    for (wT, bT) in fused_layers:
        flat_inputs += [wT, bT]
    flat_inputs += [selt_dt]

    grid = (padded // tb,)

    # xuT / out tiled over the batch (lane) axis; weights stay resident.
    in_specs = [pl.BlockSpec((state_size + action_size, tb),
                             lambda i: (0, i))]
    for arr in flat_inputs[1:]:
        in_specs.append(pl.BlockSpec(arr.shape, lambda i: (0, 0)))
    out_specs = pl.BlockSpec((state_size, tb), lambda i: (0, i))

    outT = pl.pallas_call(
        kernel,
        out_shape=jax.ShapeDtypeStruct((state_size, padded), x.dtype),
        grid=grid,
        in_specs=in_specs,
        out_specs=out_specs,
        compiler_params=pltpu.CompilerParams(
            dimension_semantics=("parallel",)),
    )(*flat_inputs)

    return outT[:, :batch].T                               # (batch, S)


# ---------------------------------------------------------------------------
# Deterministic parameter init (matches shapes of the torch nn.Linear layers;
# orthogonal weight init like init.orthogonal_, uniform bias like nn.Linear).
# ---------------------------------------------------------------------------
def orthogonal_weight(key, out_dim, in_dim):
    n, m = max(out_dim, in_dim), min(out_dim, in_dim)
    a = jax.random.normal(key, (n, m), dtype=jnp.float32)
    q, r = jnp.linalg.qr(a)
    q = q * jnp.sign(jnp.diagonal(r))[None, :]
    if out_dim >= in_dim:
        w = q[:out_dim, :in_dim]
    else:
        w = q[:in_dim, :out_dim].T
    return w  # (out_dim, in_dim), torch convention


def make_mlp_params(key, dims):
    """dims = [in, h0, ..., out]; returns list of (W (in,out), b (1,out))."""
    params = []
    for i in range(len(dims) - 1):
        key, kw, kb = jax.random.split(key, 3)
        in_d, out_d = dims[i], dims[i + 1]
        w = orthogonal_weight(kw, out_d, in_d)              # (out, in)
        bound = 1.0 / np.sqrt(in_d)
        b = jax.random.uniform(kb, (1, out_d), minval=-bound, maxval=bound,
                               dtype=jnp.float32)
        params.append((jnp.asarray(w.T, jnp.float32), b))   # store as (in, out)
    return params


# ---------------------------------------------------------------------------
# Plain-JAX reference for verification (un-fused params, matches torch module)
# ---------------------------------------------------------------------------
def reference_forward(x, u, a_params, b_params, column_names,
                      dt, min_state, max_state):
    S, Act = x.shape[1], u.shape[1]
    x_col = column_names.index('poses_x')
    y_col = column_names.index('poses_y')
    xu = jnp.concatenate([x, u], axis=-1)
    xu = xu.at[:, x_col].set(0.0).at[:, y_col].set(0.0)

    def mlp(h, params):
        for i, (w, b) in enumerate(params):
            h = h @ w + b
            if i < len(params) - 1:
                h = jax.nn.relu(h)
        return h

    A = mlp(xu, a_params).reshape(x.shape[0], S, S)
    B = mlp(xu, b_params).reshape(x.shape[0], S, Act)
    dx = jnp.einsum('bij,bj->bi', A, x) + jnp.einsum('bik,bk->bi', B, u)
    return jnp.clip(x + dx * dt, min_state, max_state)


# ---------------------------------------------------------------------------
if __name__ == "__main__":
    # Module configuration (small, consistent with the torch module).
    column_names = ['poses_x', 'poses_y', 'theta', 'vel_x', 'vel_y', 'omega']
    state_size = len(column_names)          # 6
    action_size = 2
    hidden_size = [32, 32]
    dt = 0.1
    min_state, max_state = -10.0, 10.0
    batch = 8

    key = jax.random.PRNGKey(0)
    k_x, k_u, k_a, k_b = jax.random.split(key, 4)

    x = jax.random.normal(k_x, (batch, state_size), dtype=jnp.float32)
    u = jax.random.normal(k_u, (batch, action_size), dtype=jnp.float32)

    in_dim = state_size + action_size
    a_params = make_mlp_params(
        k_a, [in_dim] + hidden_size + [state_size * state_size])
    b_params = make_mlp_params(
        k_b, [in_dim] + hidden_size + [state_size * action_size])

    out = dynamics_forward(x, u, a_params, b_params, column_names,
                           dt, min_state, max_state)
    out = jax.block_until_ready(out)

    ref = reference_forward(x, u, a_params, b_params, column_names,
                            dt, min_state, max_state)
    np.testing.assert_allclose(np.asarray(out), np.asarray(ref),
                               rtol=1e-4, atol=1e-5)

    print("KERNEL_OK")
</pallas_src>

<mosaic_0001>
module attributes {stable_mosaic.version = 11 : i64} {
  func.func @kernel(%arg0: i32, %arg1: memref<8x128xf32, #tpu.memory_space<vmem>>, %arg2: memref<112x8xf32, #tpu.memory_space<vmem>>, %arg3: memref<64x1xf32, #tpu.memory_space<vmem>>, %arg4: memref<64x64xf32, #tpu.memory_space<vmem>>, %arg5: memref<64x1xf32, #tpu.memory_space<vmem>>, %arg6: memref<48x64xf32, #tpu.memory_space<vmem>>, %arg7: memref<48x1xf32, #tpu.memory_space<vmem>>, %arg8: memref<6x48xf32, #tpu.memory_space<vmem>>, %arg9: memref<6x128xf32, #tpu.memory_space<vmem>>) attributes {dimension_semantics = [#tpu.dimension_semantics<parallel>], iteration_bounds = array<i64: 1>, scalar_prefetch = 0 : i64, scratch_operands = 0 : i64, tpu.core_type = #tpu.core_type<tc>, window_params = [{transform_indices = @transform_0, window_bounds = array<i64: 8, 128>}, {pipeline_mode = #tpu.pipeline_mode<synchronous>, transform_indices = @transform_1, window_bounds = array<i64: 112, 8>}, {pipeline_mode = #tpu.pipeline_mode<synchronous>, transform_indices = @transform_2, window_bounds = array<i64: 64, 1>}, {pipeline_mode = #tpu.pipeline_mode<synchronous>, transform_indices = @transform_3, window_bounds = array<i64: 64, 64>}, {pipeline_mode = #tpu.pipeline_mode<synchronous>, transform_indices = @transform_4, window_bounds = array<i64: 64, 1>}, {pipeline_mode = #tpu.pipeline_mode<synchronous>, transform_indices = @transform_5, window_bounds = array<i64: 48, 64>}, {pipeline_mode = #tpu.pipeline_mode<synchronous>, transform_indices = @transform_6, window_bounds = array<i64: 48, 1>}, {pipeline_mode = #tpu.pipeline_mode<synchronous>, transform_indices = @transform_7, window_bounds = array<i64: 6, 48>}, {transform_indices = @transform_8, window_bounds = array<i64: 6, 128>}]} {
    %c0 = arith.constant 0 : index
    %c0_0 = arith.constant 0 : index
    %0 = vector.load %arg1[%c0, %c0_0] : memref<8x128xf32, #tpu.memory_space<vmem>>, vector<8x128xf32>
    %c0_1 = arith.constant 0 : index
    %c0_2 = arith.constant 0 : index
    %1 = vector.load %arg2[%c0_1, %c0_2] : memref<112x8xf32, #tpu.memory_space<vmem>>, vector<112x8xf32>
    %cst = arith.constant dense<0.000000e+00> : vector<112x128xf32>
    %2 = tpu.matmul %1, %0, %cst {dimension_numbers = #tpu.dot_dimension_numbers<[1], [0], [0], [1], [0, 0, 1, 1], [], []>} : vector<112x8xf32>, vector<8x128xf32>, vector<112x128xf32> -> vector<112x128xf32>
    %3 = vector.extract_strided_slice %2 {offsets = [0, 0], sizes = [64, 128], strides = [1, 1]} : vector<112x128xf32> to vector<64x128xf32>
    %c0_3 = arith.constant 0 : index
    %c0_4 = arith.constant 0 : index
    %4 = vector.load %arg3[%c0_3, %c0_4] : memref<64x1xf32, #tpu.memory_space<vmem>>, vector<64x1xf32>
    %5 = vector.broadcast %4 : vector<64x1xf32> to vector<64x128xf32>
    %6 = arith.addf %3, %5 : vector<64x128xf32>
    %7 = vector.extract_strided_slice %2 {offsets = [64, 0], sizes = [48, 128], strides = [1, 1]} : vector<112x128xf32> to vector<48x128xf32>
    %cst_5 = arith.constant 0.000000e+00 : f32
    %8 = vector.broadcast %cst_5 : f32 to vector<64x128xf32>
    %9 = arith.maximumf %6, %8 : vector<64x128xf32>
    %c0_6 = arith.constant 0 : index
    %c0_7 = arith.constant 0 : index
    %10 = vector.load %arg4[%c0_6, %c0_7] : memref<64x64xf32, #tpu.memory_space<vmem>>, vector<64x64xf32>
    %c0_8 = arith.constant 0 : index
    %c0_9 = arith.constant 0 : index
    %11 = vector.load %arg5[%c0_8, %c0_9] : memref<64x1xf32, #tpu.memory_space<vmem>>, vector<64x1xf32>
    %cst_10 = arith.constant dense<0.000000e+00> : vector<64x128xf32>
    %12 = tpu.matmul %10, %9, %cst_10 {dimension_numbers = #tpu.dot_dimension_numbers<[1], [0], [0], [1], [0, 0, 1, 1], [], []>} : vector<64x64xf32>, vector<64x128xf32>, vector<64x128xf32> -> vector<64x128xf32>
    %13 = vector.broadcast %11 : vector<64x1xf32> to vector<64x128xf32>
    %14 = arith.addf %12, %13 : vector<64x128xf32>
    %cst_11 = arith.constant 0.000000e+00 : f32
    %15 = vector.broadcast %cst_11 : f32 to vector<64x128xf32>
    %16 = arith.maximumf %14, %15 : vector<64x128xf32>
    %c0_12 = arith.constant 0 : index
    %c0_13 = arith.constant 0 : index
    %17 = vector.load %arg6[%c0_12, %c0_13] : memref<48x64xf32, #tpu.memory_space<vmem>>, vector<48x64xf32>
    %c0_14 = arith.constant 0 : index
    %c0_15 = arith.constant 0 : index
    %18 = vector.load %arg7[%c0_14, %c0_15] : memref<48x1xf32, #tpu.memory_space<vmem>>, vector<48x1xf32>
    %cst_16 = arith.constant dense<0.000000e+00> : vector<48x128xf32>
    %19 = tpu.matmul %17, %16, %cst_16 {dimension_numbers = #tpu.dot_dimension_numbers<[1], [0], [0], [1], [0, 0, 1, 1], [], []>} : vector<48x64xf32>, vector<64x128xf32>, vector<48x128xf32> -> vector<48x128xf32>
    %20 = vector.broadcast %18 : vector<48x1xf32> to vector<48x128xf32>
    %21 = arith.addf %19, %20 : vector<48x128xf32>
    %c0_17 = arith.constant 0 : index
    %c0_18 = arith.constant 0 : index
    %22 = vector.load %arg8[%c0_17, %c0_18] : memref<6x48xf32, #tpu.memory_space<vmem>>, vector<6x48xf32>
    %23 = arith.mulf %21, %7 : vector<48x128xf32>
    %cst_19 = arith.constant dense<0.000000e+00> : vector<6x128xf32>
    %24 = tpu.matmul %22, %23, %cst_19 {dimension_numbers = #tpu.dot_dimension_numbers<[1], [0], [0], [1], [0, 0, 1, 1], [], []>} : vector<6x48xf32>, vector<48x128xf32>, vector<6x128xf32> -> vector<6x128xf32>
    %25 = vector.extract_strided_slice %0 {offsets = [0, 0], sizes = [6, 128], strides = [1, 1]} : vector<8x128xf32> to vector<6x128xf32>
    %26 = arith.addf %25, %24 : vector<6x128xf32>
    %cst_20 = arith.constant -1.000000e+01 : f32
    %cst_21 = arith.constant 1.000000e+01 : f32
    %27 = vector.broadcast %cst_20 : f32 to vector<6x128xf32>
    %28 = arith.maximumf %27, %26 : vector<6x128xf32>
    %29 = vector.broadcast %cst_21 : f32 to vector<6x128xf32>
    %30 = arith.minimumf %29, %28 : vector<6x128xf32>
    %c0_22 = arith.constant 0 : index
    %c0_23 = arith.constant 0 : index
    %31 = vector.load %arg9[%c0_22, %c0_23] : memref<6x128xf32, #tpu.memory_space<vmem>>, vector<6x128xf32>
    tpu.vector_store %arg9[%c0_22, %c0_23], %30 {strides = array<i32>} : memref<6x128xf32, #tpu.memory_space<vmem>>, vector<6x128xf32>,
    return
  }
  func.func @transform_0(%arg0: i32) -> (i32, i32) {
    %c0_i32 = arith.constant 0 : i32
    %c0_i32_0 = arith.constant 0 : i32
    return %c0_i32, %arg0 : i32, i32
  }
  func.func @transform_1(%arg0: i32) -> (i32, i32) {
    %c0_i32 = arith.constant 0 : i32
    %c0_i32_0 = arith.constant 0 : i32
    %c0_i32_1 = arith.constant 0 : i32
    return %c0_i32, %c0_i32_0 : i32, i32
  }
  func.func @transform_2(%arg0: i32) -> (i32, i32) {
    %c0_i32 = arith.constant 0 : i32
    %c0_i32_0 = arith.constant 0 : i32
    %c0_i32_1 = arith.constant 0 : i32
    return %c0_i32, %c0_i32_0 : i32, i32
  }
  func.func @transform_3(%arg0: i32) -> (i32, i32) {
    %c0_i32 = arith.constant 0 : i32
    %c0_i32_0 = arith.constant 0 : i32
    %c0_i32_1 = arith.constant 0 : i32
    return %c0_i32, %c0_i32_0 : i32, i32
  }
  func.func @transform_4(%arg0: i32) -> (i32, i32) {
    %c0_i32 = arith.constant 0 : i32
    %c0_i32_0 = arith.constant 0 : i32
    %c0_i32_1 = arith.constant 0 : i32
    return %c0_i32, %c0_i32_0 : i32, i32
  }
  func.func @transform_5(%arg0: i32) -> (i32, i32) {
    %c0_i32 = arith.constant 0 : i32
    %c0_i32_0 = arith.constant 0 : i32
    %c0_i32_1 = arith.constant 0 : i32
    return %c0_i32, %c0_i32_0 : i32, i32
  }
  func.func @transform_6(%arg0: i32) -> (i32, i32) {
    %c0_i32 = arith.constant 0 : i32
    %c0_i32_0 = arith.constant 0 : i32
    %c0_i32_1 = arith.constant 0 : i32
    return %c0_i32, %c0_i32_0 : i32, i32
  }
  func.func @transform_7(%arg0: i32) -> (i32, i32) {
    %c0_i32 = arith.constant 0 : i32
    %c0_i32_0 = arith.constant 0 : i32
    %c0_i32_1 = arith.constant 0 : i32
    return %c0_i32, %c0_i32_0 : i32, i32
  }
  func.func @transform_8(%arg0: i32) -> (i32, i32) {
    %c0_i32 = arith.constant 0 : i32
    %c0_i32_0 = arith.constant 0 : i32
    return %c0_i32, %arg0 : i32, i32
  }
}

</mosaic_0001>

<llo_original>
// kernel: tpu_custom_call.1
$region0: #{tpu_custom_call.1}
  #allocation0 [shape = 'u32[]', space=smem, size = 0x4, offset = 0x4, fixed_abs, tag = 'smem constant byte address 0x4 - core index']
  #allocation1 [shape = 'u32[144,128]{1,0:T(1,128)}', space=vmem, size = 0x12000, scoped, tag = 'internal scratch']
  %s0 = inlined_call_operand.vmem [shape: f32[8,128], index: 0, kind: input, shape index: {}]
  %s1 = inlined_call_operand.vmem [shape: f32[112,8], index: 1, kind: input, shape index: {}]
  %s2 = inlined_call_operand.vmem [shape: f32[64,1], index: 2, kind: input, shape index: {}]
  %s3 = inlined_call_operand.vmem [shape: f32[64,64], index: 3, kind: input, shape index: {}]
  %s4 = inlined_call_operand.vmem [shape: f32[64,1], index: 4, kind: input, shape index: {}]
  %s5 = inlined_call_operand.vmem [shape: f32[48,64], index: 5, kind: input, shape index: {}]
  %s6 = inlined_call_operand.vmem [shape: f32[48,1], index: 6, kind: input, shape index: {}]
  %s7 = inlined_call_operand.vmem [shape: f32[6,48], index: 7, kind: input, shape index: {}]
  %s8 = inlined_call_operand.hbm [shape: f32[6,128], index: 8, kind: output, shape index: {}]
  %s9 = sld [smem:[#allocation0]]
  $region42: #{tpu_custom_call.1} parent=0
    _
  %s11 = ssub.s32 1, %s9
  %s12 = scalar_select 0, %s11, %s9
  $region1: #{tpu_custom_call.1} parent=0
    #allocation2 [shape = 'u8[4096]{0}', space=vmem, size = 0x1000, scoped, tag = 'output window, operand 0, single buffered']
    #allocation3 [shape = 's32[1]{0}', space=sflag, size = 0x4, scoped, tag = 'scoped memory for tpu_custom_call.1']
    %13 = vsyncpa [#allocation3], 0
    // Predicated region
    $region2: #{tpu_custom_call.1} parent=1 // pred_check
      _
    $region3: #{tpu_custom_call.1} parent=1 // pred_check_branch
      %15 = sbr.rel (0) target = $region5
    $region4: #{tpu_custom_call.1} parent=1 // pred_region
      _
    $region5: #{tpu_custom_call.1} parent=1 // pred_fallthru
      _
    // Predicated region
    $region6: #{tpu_custom_call.1} parent=1 // pred_check
      _
    $region7: #{tpu_custom_call.1} parent=1 // pred_check_branch
      %17 = sbr.rel (0) target = $region9
    $region8: #{tpu_custom_call.1} parent=1 // pred_region
      _
    $region9: #{tpu_custom_call.1} parent=1 // pred_fallthru
      _
    // Predicated region
    $region10: #{tpu_custom_call.1} parent=1 // pred_check
      _
    $region11: #{tpu_custom_call.1} parent=1 // pred_check_branch
      %19 = sbr.rel (0) target = $region13
    $region12: #{tpu_custom_call.1} parent=1 // pred_region
      _
    $region13: #{tpu_custom_call.1} parent=1 // pred_fallthru
      _
    // Predicated region
    $region14: #{tpu_custom_call.1} parent=1 // pred_check
      _
    $region15: #{tpu_custom_call.1} parent=1 // pred_check_branch
      %21 = sbr.rel (0) target = $region17
    $region16: #{tpu_custom_call.1} parent=1 // pred_region
      _
    $region17: #{tpu_custom_call.1} parent=1 // pred_fallthru
      _
    // Predicated region
    $region18: #{tpu_custom_call.1} parent=1 // pred_check
      _
    $region19: #{tpu_custom_call.1} parent=1 // pred_check_branch
      %23 = sbr.rel (0) target = $region21
    $region20: #{tpu_custom_call.1} parent=1 // pred_region
      _
    $region21: #{tpu_custom_call.1} parent=1 // pred_fallthru
      _
    // Predicated region
    $region22: #{tpu_custom_call.1} parent=1 // pred_check
      _
    $region23: #{tpu_custom_call.1} parent=1 // pred_check_branch
      %25 = sbr.rel (0) target = $region25
    $region24: #{tpu_custom_call.1} parent=1 // pred_region
      _
    $region25: #{tpu_custom_call.1} parent=1 // pred_fallthru
      _
    // Predicated region
    $region26: #{tpu_custom_call.1} parent=1 // pred_check
      _
    $region27: #{tpu_custom_call.1} parent=1 // pred_check_branch
      %27 = sbr.rel (0) target = $region29
    $region28: #{tpu_custom_call.1} parent=1 // pred_region
      _
    $region29: #{tpu_custom_call.1} parent=1 // pred_fallthru
      _
    // Predicated region
    $region30: #{tpu_custom_call.1} parent=1 // pred_check
      _
    $region31: #{tpu_custom_call.1} parent=1 // pred_check_branch
      %29 = sbr.rel (0) target = $region33
    $region32: #{tpu_custom_call.1} parent=1 // pred_region
      _
    $region33: #{tpu_custom_call.1} parent=1 // pred_fallthru
      _
    %v30 = vld [vmem:[%s0] sm:$0xff]
    %v31 = vld [vmem:[%s1] sm:$0xff]
    %v32 = vld [vmem:[%s1 + $0x8] sm:$0xff]
    %v33 = vld [vmem:[%s1 + $0x10] sm:$0xff]
    %v34 = vld [vmem:[%s1 + $0x18] sm:$0xff]
    %v35 = vld [vmem:[%s1 + $0x20] sm:$0xff]
    %v36 = vld [vmem:[%s1 + $0x28] sm:$0xff]
    %v37 = vld [vmem:[%s1 + $0x30] sm:$0xff]
    %v38 = vld [vmem:[%s1 + $0x38] sm:$0xff]
    %v39 = vld [vmem:[%s1 + $0x40] sm:$0xff]
    %v40 = vld [vmem:[%s1 + $0x48] sm:$0xff]
    %v41 = vld [vmem:[%s1 + $0x50] sm:$0xff]
    %v42 = vld [vmem:[%s1 + $0x58] sm:$0xff]
    %v43 = vld [vmem:[%s1 + $0x60] sm:$0xff]
    %v44 = vld [vmem:[%s1 + $0x68] sm:$0xff]
    %vm45 = vcmask 64512
    %v47 = vsel %vm45, %v31, 0
    %v50 = vsel %vm45, %v32, 0
    %v53 = vsel %vm45, %v33, 0
    %v56 = vsel %vm45, %v34, 0
    %v59 = vsel %vm45, %v35, 0
    %v62 = vsel %vm45, %v36, 0
    %v65 = vsel %vm45, %v37, 0
    %v68 = vsel %vm45, %v38, 0
    %v71 = vsel %vm45, %v39, 0
    %v74 = vsel %vm45, %v40, 0
    %v77 = vsel %vm45, %v41, 0
    %v80 = vsel %vm45, %v42, 0
    %v83 = vsel %vm45, %v43, 0
    %v86 = vsel %vm45, %v44, 0
    %88 = vmatprep.subr.mxu0 0.0
    %89 = vmatpush1.msra.mxu0 %v30
    %90 = vmatprep.subr.mxu0 0.0
    %91 = vmatpush1.msra.mxu0 0.0
    %92 = vmatprep.subr.mxu0 0.0
    %93 = vmatpush1.msra.mxu0 0.0
    %94 = vmatprep.subr.mxu0 0.0
    %95 = vmatpush1.msra.mxu0 0.0
    %96 = vmatprep.subr.mxu0 0.0
    %97 = vmatpush1.msra.mxu0 0.0
    %98 = vmatprep.subr.mxu0 0.0
    %99 = vmatpush1.msra.mxu0 0.0
    %100 = vmatprep.subr.mxu0 0.0
    %101 = vmatpush1.msra.mxu0 0.0
    %102 = vmatprep.subr.mxu0 0.0
    %103 = vmatpush1.msra.mxu0 0.0
    %104 = vmatprep.subr.mxu0 0.0
    %105 = vmatpush1.msra.mxu0 0.0
    %106 = vmatprep.subr.mxu0 0.0
    %107 = vmatpush1.msra.mxu0 0.0
    %108 = vmatprep.subr.mxu0 0.0
    %109 = vmatpush1.msra.mxu0 0.0
    %110 = vmatprep.subr.mxu0 0.0
    %111 = vmatpush1.msra.mxu0 0.0
    %112 = vmatprep.subr.mxu0 0.0
    %113 = vmatpush1.msra.mxu0 0.0
    %114 = vmatprep.subr.mxu0 0.0
    %115 = vmatpush1.msra.mxu0 0.0
    %116 = vmatprep.subr.mxu0 0.0
    %117 = vmatpush1.msra.mxu0 0.0
    %118 = vmatprep.subr.mxu0 0.0
    %119 = vmatpush1.msra.mxu0 0.0
    %120 = vmatprep.subr.mxu0 0.0
    %121 = vmatpush1.msra.mxu0 0.0
    %122 = vmatprep.subr.mxu0 0.0
    %123 = vmatpush1.msra.mxu0 0.0
    %124 = vmatprep.subr.mxu0 0.0
    %125 = vmatpush1.msra.mxu0 0.0
    %126 = vmatprep.subr.mxu0 0.0
    %127 = vmatpush1.msra.mxu0 0.0
    %128 = vmatprep.subr.mxu0 0.0
    %129 = vmatpush1.msra.mxu0 0.0
    %130 = vmatprep.subr.mxu0 0.0
    %131 = vmatpush1.msra.mxu0 0.0
    %132 = vmatprep.subr.mxu0 0.0
    %133 = vmatpush1.msra.mxu0 0.0
    %134 = vmatprep.subr.mxu0 0.0
    %135 = vmatpush1.msra.mxu0 0.0
    %136 = vmatprep.subr.mxu0 0.0
    %137 = vmatpush1.msra.mxu0 0.0
    %138 = vmatprep.subr.mxu0 0.0
    %139 = vmatpush1.msra.mxu0 0.0
    %140 = vmatprep.subr.mxu0 0.0
    %141 = vmatpush1.msra.mxu0 0.0
    %142 = vmatprep.subr.mxu0 0.0
    %143 = vmatpush1.msra.mxu0 0.0
    %144 = vmatprep.subr.mxu0 0.0
    %145 = vmatpush1.msra.mxu0 0.0
    %146 = vmatprep.subr.mxu0 0.0
    %147 = vmatpush1.msra.mxu0 0.0
    %148 = vmatprep.subr.mxu0 0.0
    %149 = vmatpush1.msra.mxu0 0.0
    %150 = vmatprep.subr.mxu0 0.0
    %151 = vmatpush1.msra.mxu0 0.0
    %152 = vmatprep.mubr.f32.mxu0 0.0
    %153 = vmatmul.mubr.f32.gmra.mrb[0].mxu0 %v47
    %v154 = vpop.f32.mrb[0].mxu0
    %v155 = vadd.f32 0.0, %v154
    %v156 = vpop.f32.mrb[0].mxu0
    %157 = vmatprep.mubr.f32.mxu0 0.0
    %158 = vmatmul.mubr.f32.gmra.mrb[0].mxu0 %v50
    %v159 = vpop.f32.mrb[0].mxu0
    %v160 = vadd.f32 0.0, %v159
    %v161 = vpop.f32.mrb[0].mxu0
    %162 = vmatprep.mubr.f32.mxu0 0.0
    %163 = vmatmul.mubr.f32.gmra.mrb[0].mxu0 %v53
    %v164 = vpop.f32.mrb[0].mxu0
    %v165 = vadd.f32 0.0, %v164
    %v166 = vpop.f32.mrb[0].mxu0
    %167 = vmatprep.mubr.f32.mxu0 0.0
    %168 = vmatmul.mubr.f32.gmra.mrb[0].mxu0 %v56
    %v169 = vpop.f32.mrb[0].mxu0
    %v170 = vadd.f32 0.0, %v169
    %v171 = vpop.f32.mrb[0].mxu0
    %172 = vmatprep.mubr.f32.mxu0 0.0
    %173 = vmatmul.mubr.f32.gmra.mrb[0].mxu0 %v59
    %v174 = vpop.f32.mrb[0].mxu0
    %v175 = vadd.f32 0.0, %v174
    %v176 = vpop.f32.mrb[0].mxu0
    %177 = vmatprep.mubr.f32.mxu0 0.0
    %178 = vmatmul.mubr.f32.gmra.mrb[0].mxu0 %v62
    %v179 = vpop.f32.mrb[0].mxu0
    %v180 = vadd.f32 0.0, %v179
    %v181 = vpop.f32.mrb[0].mxu0
    %182 = vmatprep.mubr.f32.mxu0 0.0
    %183 = vmatmul.mubr.f32.gmra.mrb[0].mxu0 %v65
    %v184 = vpop.f32.mrb[0].mxu0
    %v185 = vadd.f32 0.0, %v184
    %v186 = vpop.f32.mrb[0].mxu0
    %187 = vmatprep.mubr.f32.mxu0 0.0
    %188 = vmatmul.mubr.f32.gmra.mrb[0].mxu0 %v68
    %v189 = vpop.f32.mrb[0].mxu0
    %v190 = vadd.f32 0.0, %v189
    %v191 = vpop.f32.mrb[0].mxu0
    %192 = vmatprep.mubr.f32.mxu0 0.0
    %193 = vmatmul.mubr.f32.gmra.mrb[0].mxu0 %v71
    %v194 = vpop.f32.mrb[0].mxu0
    %v195 = vadd.f32 0.0, %v194
    %v196 = vpop.f32.mrb[0].mxu0
    %197 = vmatprep.mubr.f32.mxu0 0.0
    %198 = vmatmul.mubr.f32.gmra.mrb[0].mxu0 %v74
    %v199 = vpop.f32.mrb[0].mxu0
    %v200 = vadd.f32 0.0, %v199
    %v201 = vpop.f32.mrb[0].mxu0
    %202 = vmatprep.mubr.f32.mxu0 0.0
    %203 = vmatmul.mubr.f32.gmra.mrb[0].mxu0 %v77
    %v204 = vpop.f32.mrb[0].mxu0
    %v205 = vadd.f32 0.0, %v204
    %v206 = vpop.f32.mrb[0].mxu0
    %207 = vmatprep.mubr.f32.mxu0 0.0
    %208 = vmatmul.mubr.f32.gmra.mrb[0].mxu0 %v80
    %v209 = vpop.f32.mrb[0].mxu0
    %v210 = vadd.f32 0.0, %v209
    %v211 = vpop.f32.mrb[0].mxu0
    %212 = vmatprep.mubr.f32.mxu0 0.0
    %213 = vmatmul.mubr.f32.gmra.mrb[0].mxu0 %v83
    %v214 = vpop.f32.mrb[0].mxu0
    %v215 = vadd.f32 0.0, %v214
    %v216 = vpop.f32.mrb[0].mxu0
    %217 = vmatprep.mubr.f32.mxu0 0.0
    %218 = vmatmul.mubr.f32.gmra.mrb[0].mxu0 %v86
    %v219 = vpop.f32.mrb[0].mxu0
    %v220 = vadd.f32 0.0, %v219
    %v221 = vpop.f32.mrb[0].mxu0
    %222 = vdwg.mxu0
    %v223 = vld [vmem:[%s2] sm:$0xff]
    %v224 = vld [vmem:[%s2 + $0x8] sm:$0xff]
    %v225 = vld [vmem:[%s2 + $0x10] sm:$0xff]
    %v226 = vld [vmem:[%s2 + $0x18] sm:$0xff]
    %v227 = vld [vmem:[%s2 + $0x20] sm:$0xff]
    %v228 = vld [vmem:[%s2 + $0x28] sm:$0xff]
    %v229 = vld [vmem:[%s2 + $0x30] sm:$0xff]
    %v230 = vld [vmem:[%s2 + $0x38] sm:$0xff]
    %232 = vset.pattern.permute.xlu0 0
    %233 = vperm.xlu0 %232, %v223
    %v234 = vpop.permute.xlu0 %233
    %237 = vset.pattern.permute.xlu0 0
    %238 = vperm.xlu0 %237, %v224
    %v239 = vpop.permute.xlu0 %238
    %242 = vset.pattern.permute.xlu0 0
    %243 = vperm.xlu0 %242, %v225
    %v244 = vpop.permute.xlu0 %243
    %247 = vset.pattern.permute.xlu0 0
    %248 = vperm.xlu0 %247, %v226
    %v249 = vpop.permute.xlu0 %248
    %252 = vset.pattern.permute.xlu0 0
    %253 = vperm.xlu0 %252, %v227
    %v254 = vpop.permute.xlu0 %253
    %257 = vset.pattern.permute.xlu0 0
    %258 = vperm.xlu0 %257, %v228
    %v259 = vpop.permute.xlu0 %258
    %262 = vset.pattern.permute.xlu0 0
    %263 = vperm.xlu0 %262, %v229
    %v264 = vpop.permute.xlu0 %263
    %267 = vset.pattern.permute.xlu0 0
    %268 = vperm.xlu0 %267, %v230
    %v269 = vpop.permute.xlu0 %268
    %v271 = vadd.f32 %v155, %v234
    %v272 = vadd.f32 %v160, %v239
    %v273 = vadd.f32 %v165, %v244
    %v274 = vadd.f32 %v170, %v249
    %v275 = vadd.f32 %v175, %v254
    %v276 = vadd.f32 %v180, %v259
    %v277 = vadd.f32 %v185, %v264
    %v278 = vadd.f32 %v190, %v269
    %v279 = vmax.f32 %v271, 0.0
    %v280 = vmax.f32 %v272, 0.0
    %v281 = vmax.f32 %v273, 0.0
    %v282 = vmax.f32 %v274, 0.0
    %v283 = vmax.f32 %v275, 0.0
    %v284 = vmax.f32 %v276, 0.0
    %v285 = vmax.f32 %v277, 0.0
    %v286 = vmax.f32 %v278, 0.0
    %v287 = vld [vmem:[%s3] sm:$0xff]
    %v288 = vld [vmem:[%s3 + $0x8] sm:$0xff]
    %v289 = vld [vmem:[%s3 + $0x10] sm:$0xff]
    %v290 = vld [vmem:[%s3 + $0x18] sm:$0xff]
    %v291 = vld [vmem:[%s3 + $0x20] sm:$0xff]
    %v292 = vld [vmem:[%s3 + $0x28] sm:$0xff]
    %v293 = vld [vmem:[%s3 + $0x30] sm:$0xff]
    %v294 = vld [vmem:[%s3 + $0x38] sm:$0xff]
    %v295 = vld [vmem:[%s4] sm:$0xff]
    %v296 = vld [vmem:[%s4 + $0x8] sm:$0xff]
    %v297 = vld [vmem:[%s4 + $0x10] sm:$0xff]
    %v298 = vld [vmem:[%s4 + $0x18] sm:$0xff]
    %v299 = vld [vmem:[%s4 + $0x20] sm:$0xff]
    %v300 = vld [vmem:[%s4 + $0x28] sm:$0xff]
    %v301 = vld [vmem:[%s4 + $0x30] sm:$0xff]
    %v302 = vld [vmem:[%s4 + $0x38] sm:$0xff]
    %304 = vset.pattern.permute.xlu0 0
    %305 = vperm.xlu0 %304, %v295
    %v306 = vpop.permute.xlu0 %305
    %309 = vset.pattern.permute.xlu0 0
    %310 = vperm.xlu0 %309, %v296
    %v311 = vpop.permute.xlu0 %310
    %314 = vset.pattern.permute.xlu0 0
    %315 = vperm.xlu0 %314, %v297
    %v316 = vpop.permute.xlu0 %315
    %319 = vset.pattern.permute.xlu0 0
    %320 = vperm.xlu0 %319, %v298
    %v321 = vpop.permute.xlu0 %320
    %324 = vset.pattern.permute.xlu0 0
    %325 = vperm.xlu0 %324, %v299
    %v326 = vpop.permute.xlu0 %325
    %329 = vset.pattern.permute.xlu0 0
    %330 = vperm.xlu0 %329, %v300
    %v331 = vpop.permute.xlu0 %330
    %334 = vset.pattern.permute.xlu0 0
    %335 = vperm.xlu0 %334, %v301
    %v336 = vpop.permute.xlu0 %335
    %339 = vset.pattern.permute.xlu0 0
    %340 = vperm.xlu0 %339, %v302
    %v341 = vpop.permute.xlu0 %340
    %vm343 = vcmask 523264
    %v345 = vsel %vm343, %v287, 0
    %v348 = vsel %vm343, %v288, 0
    %v351 = vsel %vm343, %v289, 0
    %v354 = vsel %vm343, %v290, 0
    %v357 = vsel %vm343, %v291, 0
    %v360 = vsel %vm343, %v292, 0
    %v363 = vsel %vm343, %v293, 0
    %v366 = vsel %vm343, %v294, 0
    %368 = vmatprep.subr.mxu0 0.0
    %369 = vmatpush1.msra.mxu0 %v279
    %370 = vmatprep.subr.mxu0 0.0
    %371 = vmatpush1.msra.mxu0 %v280
    %372 = vmatprep.subr.mxu0 0.0
    %373 = vmatpush1.msra.mxu0 %v281
    %374 = vmatprep.subr.mxu0 0.0
    %375 = vmatpush1.msra.mxu0 %v282
    %376 = vmatprep.subr.mxu0 0.0
    %377 = vmatpush1.msra.mxu0 %v283
    %378 = vmatprep.subr.mxu0 0.0
    %379 = vmatpush1.msra.mxu0 %v284
    %380 = vmatprep.subr.mxu0 0.0
    %381 = vmatpush1.msra.mxu0 %v285
    %382 = vmatprep.subr.mxu0 0.0
    %383 = vmatpush1.msra.mxu0 %v286
    %384 = vmatprep.subr.mxu0 0.0
    %385 = vmatpush1.msra.mxu0 0.0
    %386 = vmatprep.subr.mxu0 0.0
    %387 = vmatpush1.msra.mxu0 0.0
    %388 = vmatprep.subr.mxu0 0.0
    %389 = vmatpush1.msra.mxu0 0.0
    %390 = vmatprep.subr.mxu0 0.0
    %391 = vmatpush1.msra.mxu0 0.0
    %392 = vmatprep.subr.mxu0 0.0
    %393 = vmatpush1.msra.mxu0 0.0
    %394 = vmatprep.subr.mxu0 0.0
    %395 = vmatpush1.msra.mxu0 0.0
    %396 = vmatprep.subr.mxu0 0.0
    %397 = vmatpush1.msra.mxu0 0.0
    %398 = vmatprep.subr.mxu0 0.0
    %399 = vmatpush1.msra.mxu0 0.0
    %400 = vmatprep.subr.mxu0 0.0
    %401 = vmatpush1.msra.mxu0 0.0
    %402 = vmatprep.subr.mxu0 0.0
    %403 = vmatpush1.msra.mxu0 0.0
    %404 = vmatprep.subr.mxu0 0.0
    %405 = vmatpush1.msra.mxu0 0.0
    %406 = vmatprep.subr.mxu0 0.0
    %407 = vmatpush1.msra.mxu0 0.0
    %408 = vmatprep.subr.mxu0 0.0
    %409 = vmatpush1.msra.mxu0 0.0
    %410 = vmatprep.subr.mxu0 0.0
    %411 = vmatpush1.msra.mxu0 0.0
    %412 = vmatprep.subr.mxu0 0.0
    %413 = vmatpush1.msra.mxu0 0.0
    %414 = vmatprep.subr.mxu0 0.0
    %415 = vmatpush1.msra.mxu0 0.0
    %416 = vmatprep.subr.mxu0 0.0
    %417 = vmatpush1.msra.mxu0 0.0
    %418 = vmatprep.subr.mxu0 0.0
    %419 = vmatpush1.msra.mxu0 0.0
    %420 = vmatprep.subr.mxu0 0.0
    %421 = vmatpush1.msra.mxu0 0.0
    %422 = vmatprep.subr.mxu0 0.0
    %423 = vmatpush1.msra.mxu0 0.0
    %424 = vmatprep.subr.mxu0 0.0
    %425 = vmatpush1.msra.mxu0 0.0
    %426 = vmatprep.subr.mxu0 0.0
    %427 = vmatpush1.msra.mxu0 0.0
    %428 = vmatprep.subr.mxu0 0.0
    %429 = vmatpush1.msra.mxu0 0.0
    %430 = vmatprep.subr.mxu0 0.0
    %431 = vmatpush1.msra.mxu0 0.0
    %432 = vmatprep.mubr.f32.mxu0 0.0
    %433 = vmatmul.mubr.f32.gmra.mrb[0].mxu0 %v345
    %v434 = vpop.f32.mrb[0].mxu0
    %v435 = vadd.f32 %v306, %v434
    %v436 = vpop.f32.mrb[0].mxu0
    %437 = vmatprep.mubr.f32.mxu0 0.0
    %438 = vmatmul.mubr.f32.gmra.mrb[0].mxu0 %v348
    %v439 = vpop.f32.mrb[0].mxu0
    %v440 = vadd.f32 %v311, %v439
    %v441 = vpop.f32.mrb[0].mxu0
    %442 = vmatprep.mubr.f32.mxu0 0.0
    %443 = vmatmul.mubr.f32.gmra.mrb[0].mxu0 %v351
    %v444 = vpop.f32.mrb[0].mxu0
    %v445 = vadd.f32 %v316, %v444
    %v446 = vpop.f32.mrb[0].mxu0
    %447 = vmatprep.mubr.f32.mxu0 0.0
    %448 = vmatmul.mubr.f32.gmra.mrb[0].mxu0 %v354
    %v449 = vpop.f32.mrb[0].mxu0
    %v450 = vadd.f32 %v321, %v449
    %v451 = vpop.f32.mrb[0].mxu0
    %452 = vmatprep.mubr.f32.mxu0 0.0
    %453 = vmatmul.mubr.f32.gmra.mrb[0].mxu0 %v357
    %v454 = vpop.f32.mrb[0].mxu0
    %v455 = vadd.f32 %v326, %v454
    %v456 = vpop.f32.mrb[0].mxu0
    %457 = vmatprep.mubr.f32.mxu0 0.0
    %458 = vmatmul.mubr.f32.gmra.mrb[0].mxu0 %v360
    %v459 = vpop.f32.mrb[0].mxu0
    %v460 = vadd.f32 %v331, %v459
    %v461 = vpop.f32.mrb[0].mxu0
    %462 = vmatprep.mubr.f32.mxu0 0.0
    %463 = vmatmul.mubr.f32.gmra.mrb[0].mxu0 %v363
    %v464 = vpop.f32.mrb[0].mxu0
    %v465 = vadd.f32 %v336, %v464
    %v466 = vpop.f32.mrb[0].mxu0
    %467 = vmatprep.mubr.f32.mxu0 0.0
    %468 = vmatmul.mubr.f32.gmra.mrb[0].mxu0 %v366
    %v469 = vpop.f32.mrb[0].mxu0
    %v470 = vadd.f32 %v341, %v469
    %v471 = vpop.f32.mrb[0].mxu0
    %472 = vdwg.mxu0
    %v473 = vmax.f32 %v435, 0.0
    %v474 = vmax.f32 %v440, 0.0
    %v475 = vmax.f32 %v445, 0.0
    %v476 = vmax.f32 %v450, 0.0
    %v477 = vmax.f32 %v455, 0.0
    %v478 = vmax.f32 %v460, 0.0
    %v479 = vmax.f32 %v465, 0.0
    %v480 = vmax.f32 %v470, 0.0
    %v481 = vld [vmem:[%s5] sm:$0xff]
    %v482 = vld [vmem:[%s5 + $0x8] sm:$0xff]
    %v483 = vld [vmem:[%s5 + $0x10] sm:$0xff]
    %v484 = vld [vmem:[%s5 + $0x18] sm:$0xff]
    %v485 = vld [vmem:[%s5 + $0x20] sm:$0xff]
    %v486 = vld [vmem:[%s5 + $0x28] sm:$0xff]
    %v487 = vld [vmem:[%s6] sm:$0xff]
    %v488 = vld [vmem:[%s6 + $0x8] sm:$0xff]
    %v489 = vld [vmem:[%s6 + $0x10] sm:$0xff]
    %v490 = vld [vmem:[%s6 + $0x18] sm:$0xff]
    %v491 = vld [vmem:[%s6 + $0x20] sm:$0xff]
    %v492 = vld [vmem:[%s6 + $0x28] sm:$0xff]
    %494 = vset.pattern.permute.xlu0 0
    %495 = vperm.xlu0 %494, %v487
    %v496 = vpop.permute.xlu0 %495
    %499 = vset.pattern.permute.xlu0 0
    %500 = vperm.xlu0 %499, %v488
    %v501 = vpop.permute.xlu0 %500
    %504 = vset.pattern.permute.xlu0 0
    %505 = vperm.xlu0 %504, %v489
    %v506 = vpop.permute.xlu0 %505
    %509 = vset.pattern.permute.xlu0 0
    %510 = vperm.xlu0 %509, %v490
    %v511 = vpop.permute.xlu0 %510
    %514 = vset.pattern.permute.xlu0 0
    %515 = vperm.xlu0 %514, %v491
    %v516 = vpop.permute.xlu0 %515
    %519 = vset.pattern.permute.xlu0 0
    %520 = vperm.xlu0 %519, %v492
    %v521 = vpop.permute.xlu0 %520
    %v524 = vsel %vm343, %v481, 0
    %v527 = vsel %vm343, %v482, 0
    %v530 = vsel %vm343, %v483, 0
    %v533 = vsel %vm343, %v484, 0
    %v536 = vsel %vm343, %v485, 0
    %v539 = vsel %vm343, %v486, 0
    %541 = vmatprep.subr.mxu0 0.0
    %542 = vmatpush1.msra.mxu0 %v473
    %543 = vmatprep.subr.mxu0 0.0
    %544 = vmatpush1.msra.mxu0 %v474
    %545 = vmatprep.subr.mxu0 0.0
    %546 = vmatpush1.msra.mxu0 %v475
    %547 = vmatprep.subr.mxu0 0.0
    %548 = vmatpush1.msra.mxu0 %v476
    %549 = vmatprep.subr.mxu0 0.0
    %550 = vmatpush1.msra.mxu0 %v477
    %551 = vmatprep.subr.mxu0 0.0
    %552 = vmatpush1.msra.mxu0 %v478
    %553 = vmatprep.subr.mxu0 0.0
    %554 = vmatpush1.msra.mxu0 %v479
    %555 = vmatprep.subr.mxu0 0.0
    %556 = vmatpush1.msra.mxu0 %v480
    %557 = vmatprep.subr.mxu0 0.0
    %558 = vmatpush1.msra.mxu0 0.0
    %559 = vmatprep.subr.mxu0 0.0
    %560 = vmatpush1.msra.mxu0 0.0
    %561 = vmatprep.subr.mxu0 0.0
    %562 = vmatpush1.msra.mxu0 0.0
    %563 = vmatprep.subr.mxu0 0.0
    %564 = vmatpush1.msra.mxu0 0.0
    %565 = vmatprep.subr.mxu0 0.0
    %566 = vmatpush1.msra.mxu0 0.0
    %567 = vmatprep.subr.mxu0 0.0
    %568 = vmatpush1.msra.mxu0 0.0
    %569 = vmatprep.subr.mxu0 0.0
    %570 = vmatpush1.msra.mxu0 0.0
    %571 = vmatprep.subr.mxu0 0.0
    %572 = vmatpush1.msra.mxu0 0.0
    %573 = vmatprep.subr.mxu0 0.0
    %574 = vmatpush1.msra.mxu0 0.0
    %575 = vmatprep.subr.mxu0 0.0
    %576 = vmatpush1.msra.mxu0 0.0
    %577 = vmatprep.subr.mxu0 0.0
    %578 = vmatpush1.msra.mxu0 0.0
    %579 = vmatprep.subr.mxu0 0.0
    %580 = vmatpush1.msra.mxu0 0.0
    %581 = vmatprep.subr.mxu0 0.0
    %582 = vmatpush1.msra.mxu0 0.0
    %583 = vmatprep.subr.mxu0 0.0
    %584 = vmatpush1.msra.mxu0 0.0
    %585 = vmatprep.subr.mxu0 0.0
    %586 = vmatpush1.msra.mxu0 0.0
    %587 = vmatprep.subr.mxu0 0.0
    %588 = vmatpush1.msra.mxu0 0.0
    %589 = vmatprep.subr.mxu0 0.0
    %590 = vmatpush1.msra.mxu0 0.0
    %591 = vmatprep.subr.mxu0 0.0
    %592 = vmatpush1.msra.mxu0 0.0
    %593 = vmatprep.subr.mxu0 0.0
    %594 = vmatpush1.msra.mxu0 0.0
    %595 = vmatprep.subr.mxu0 0.0
    %596 = vmatpush1.msra.mxu0 0.0
    %597 = vmatprep.subr.mxu0 0.0
    %598 = vmatpush1.msra.mxu0 0.0
    %599 = vmatprep.subr.mxu0 0.0
    %600 = vmatpush1.msra.mxu0 0.0
    %601 = vmatprep.subr.mxu0 0.0
    %602 = vmatpush1.msra.mxu0 0.0
    %603 = vmatprep.subr.mxu0 0.0
    %604 = vmatpush1.msra.mxu0 0.0
    %605 = vmatprep.mubr.f32.mxu0 0.0
    %606 = vmatmul.mubr.f32.gmra.mrb[0].mxu0 %v524
    %v607 = vpop.f32.mrb[0].mxu0
    %v608 = vadd.f32 %v496, %v607
    %v609 = vpop.f32.mrb[0].mxu0
    %610 = vmatprep.mubr.f32.mxu0 0.0
    %611 = vmatmul.mubr.f32.gmra.mrb[0].mxu0 %v527
    %v612 = vpop.f32.mrb[0].mxu0
    %v613 = vadd.f32 %v501, %v612
    %v614 = vpop.f32.mrb[0].mxu0
    %615 = vmatprep.mubr.f32.mxu0 0.0
    %616 = vmatmul.mubr.f32.gmra.mrb[0].mxu0 %v530
    %v617 = vpop.f32.mrb[0].mxu0
    %v618 = vadd.f32 %v506, %v617
    %v619 = vpop.f32.mrb[0].mxu0
    %620 = vmatprep.mubr.f32.mxu0 0.0
    %621 = vmatmul.mubr.f32.gmra.mrb[0].mxu0 %v533
    %v622 = vpop.f32.mrb[0].mxu0
    %v623 = vadd.f32 %v511, %v622
    %v624 = vpop.f32.mrb[0].mxu0
    %625 = vmatprep.mubr.f32.mxu0 0.0
    %626 = vmatmul.mubr.f32.gmra.mrb[0].mxu0 %v536
    %v627 = vpop.f32.mrb[0].mxu0
    %v628 = vadd.f32 %v516, %v627
    %v629 = vpop.f32.mrb[0].mxu0
    %630 = vmatprep.mubr.f32.mxu0 0.0
    %631 = vmatmul.mubr.f32.gmra.mrb[0].mxu0 %v539
    %v632 = vpop.f32.mrb[0].mxu0
    %v633 = vadd.f32 %v521, %v632
    %v634 = vpop.f32.mrb[0].mxu0
    %635 = vdwg.mxu0
    %v636 = vld [vmem:[%s7] sm:$0x3f]
    %v637 = vmul.f32 %v608, %v195
    %v638 = vmul.f32 %v613, %v200
    %v639 = vmul.f32 %v618, %v205
    %v640 = vmul.f32 %v623, %v210
    %v641 = vmul.f32 %v628, %v215
    %v642 = vmul.f32 %v633, %v220
    %vm643 = vcmask 392192
    %v645 = vsel %vm643, %v636, 0
    %647 = vmatprep.subr.mxu0 0.0
    %648 = vmatpush1.msra.mxu0 %v637
    %649 = vmatprep.subr.mxu0 0.0
    %650 = vmatpush1.msra.mxu0 %v638
    %651 = vmatprep.subr.mxu0 0.0
    %652 = vmatpush1.msra.mxu0 %v639
    %653 = vmatprep.subr.mxu0 0.0
    %654 = vmatpush1.msra.mxu0 %v640
    %655 = vmatprep.subr.mxu0 0.0
    %656 = vmatpush1.msra.mxu0 %v641
    %657 = vmatprep.subr.mxu0 0.0
    %658 = vmatpush1.msra.mxu0 %v642
    %659 = vmatprep.subr.mxu0 0.0
    %660 = vmatpush1.msra.mxu0 0.0
    %661 = vmatprep.subr.mxu0 0.0
    %662 = vmatpush1.msra.mxu0 0.0
    %663 = vmatprep.subr.mxu0 0.0
    %664 = vmatpush1.msra.mxu0 0.0
    %665 = vmatprep.subr.mxu0 0.0
    %666 = vmatpush1.msra.mxu0 0.0
    %667 = vmatprep.subr.mxu0 0.0
    %668 = vmatpush1.msra.mxu0 0.0
    %669 = vmatprep.subr.mxu0 0.0
    %670 = vmatpush1.msra.mxu0 0.0
    %671 = vmatprep.subr.mxu0 0.0
    %672 = vmatpush1.msra.mxu0 0.0
    %673 = vmatprep.subr.mxu0 0.0
    %674 = vmatpush1.msra.mxu0 0.0
    %675 = vmatprep.subr.mxu0 0.0
    %676 = vmatpush1.msra.mxu0 0.0
    %677 = vmatprep.subr.mxu0 0.0
    %678 = vmatpush1.msra.mxu0 0.0
    %679 = vmatprep.subr.mxu0 0.0
    %680 = vmatpush1.msra.mxu0 0.0
    %681 = vmatprep.subr.mxu0 0.0
    %682 = vmatpush1.msra.mxu0 0.0
    %683 = vmatprep.subr.mxu0 0.0
    %684 = vmatpush1.msra.mxu0 0.0
    %685 = vmatprep.subr.mxu0 0.0
    %686 = vmatpush1.msra.mxu0 0.0
    %687 = vmatprep.subr.mxu0 0.0
    %688 = vmatpush1.msra.mxu0 0.0
    %689 = vmatprep.subr.mxu0 0.0
    %690 = vmatpush1.msra.mxu0 0.0
    %691 = vmatprep.subr.mxu0 0.0
    %692 = vmatpush1.msra.mxu0 0.0
    %693 = vmatprep.subr.mxu0 0.0
    %694 = vmatpush1.msra.mxu0 0.0
    %695 = vmatprep.subr.mxu0 0.0
    %696 = vmatpush1.msra.mxu0 0.0
    %697 = vmatprep.subr.mxu0 0.0
    %698 = vmatpush1.msra.mxu0 0.0
    %699 = vmatprep.subr.mxu0 0.0
    %700 = vmatpush1.msra.mxu0 0.0
    %701 = vmatprep.subr.mxu0 0.0
    %702 = vmatpush1.msra.mxu0 0.0
    %703 = vmatprep.subr.mxu0 0.0
    %704 = vmatpush1.msra.mxu0 0.0
    %705 = vmatprep.subr.mxu0 0.0
    %706 = vmatpush1.msra.mxu0 0.0
    %707 = vmatprep.subr.mxu0 0.0
    %708 = vmatpush1.msra.mxu0 0.0
    %709 = vmatprep.subr.mxu0 0.0
    %710 = vmatpush1.msra.mxu0 0.0
    %711 = vmatprep.mubr.f32.mxu0 0.0
    %712 = vmatmul.mubr.f32.gmra.mrb[0].mxu0 %v645
    %v713 = vpop.f32.mrb[0].mxu0
    %v714 = vadd.f32 0.0, %v713
    %v715 = vpop.f32.mrb[0].mxu0
    %716 = vdwg.mxu0
    %v717 = vadd.f32 %v30, %v714
    %v718 = vmax.f32 %v717, -10.0
    %v719 = vmin.f32 %v718, 10.0
    %720 = vst [vmem:[#allocation2] sm:$0x3f] %v719
    // Predicated region
    $region34: #{tpu_custom_call.1} parent=1 // pred_check
      _
    $region35: #{tpu_custom_call.1} parent=1 // pred_check_branch
      %722 = sbr.rel (0) target = $region37
    $region36: #{tpu_custom_call.1} parent=1 // pred_region
      %s724 = ssub.s32 128, 128
      %725 = vsyncadd [#allocation3], %s724
      %s727 = sshll.u32 [#allocation2], 4
      %s728 = int_to_ptr.vmem [resolvable:$true] %s727
      %730 = dma.vmem_to_hbm [thread:$0]  %s728, 128, %s8, [#allocation3]
    $region37: #{tpu_custom_call.1} parent=1 // pred_fallthru
      _
    // Predicated region
    $region38: #{tpu_custom_call.1} parent=1 // pred_check
      _
    $region39: #{tpu_custom_call.1} parent=1 // pred_check_branch
      %732 = sbr.rel (0) target = $region41
    $region40: #{tpu_custom_call.1} parent=1 // pred_region
      %733 = dma.done [#allocation3], 128
    $region41: #{tpu_custom_call.1} parent=1 // pred_fallthru
      _
    %734 = vsyncpa [#allocation3], 1

</llo_original>
